<compile_context>
chip_gen: v6e
topology: v6e:2x2x1
jax: 0.10.0
libtpu: 0.0.40
codegen_flags: <defaults>
</compile_context>

<pallas_src>
import jax
import jax.numpy as jnp
from jax.experimental import pallas as pl
from jax.experimental.pallas import tpu as pltpu

HID1, HID2, HID3 = 128, 256, 128
HEAD_LANES = 128          # fused (actor | critic | zero-pad) head width, lane-dense


def ac_kernel(x_ref,
              w1_ref, b1_ref,
              w2_ref, b2_ref,
              w3_ref, b3_ref,
              wh_ref, bh_ref,
              head_ref):
    # MXU inputs in bf16, accumulate in f32; ReLU / adds stay f32 (v5e-safe).
    x = x_ref[...].astype(jnp.bfloat16)

    h1 = jnp.dot(x, w1_ref[...], preferred_element_type=jnp.float32) + b1_ref[...]
    h1 = jnp.maximum(h1, 0.0)

    h2 = jnp.dot(h1.astype(jnp.bfloat16), w2_ref[...],
                 preferred_element_type=jnp.float32) + b2_ref[...]
    h2 = jnp.maximum(h2, 0.0)

    h3 = jnp.dot(h2.astype(jnp.bfloat16), w3_ref[...],
                 preferred_element_type=jnp.float32) + b3_ref[...]
    h3 = jnp.maximum(h3, 0.0)

    # Fused actor|critic head: one MXU push, one unmasked lane-dense store.
    head_ref[...] = (jnp.dot(h3.astype(jnp.bfloat16), wh_ref[...],
                             preferred_element_type=jnp.float32) + bh_ref[...])


def ac_forward(x, params, *, tile_b=128):
    """x: [B, input_size] float32.  Returns (policy [B, A], critic [B, 1])."""
    B, in_dim = x.shape
    A = params["wa"].shape[1]
    assert A + 1 <= HEAD_LANES

    # --- fused, lane-padded head (built once, wrapper-side) -------------------
    w_head = jnp.zeros((HID3, HEAD_LANES), jnp.float32)
    w_head = w_head.at[:, :A].set(params["wa"]).at[:, A:A + 1].set(params["wc"])
    b_head = jnp.zeros((1, HEAD_LANES), jnp.float32)
    b_head = b_head.at[:, :A].set(params["ba"]).at[:, A:A + 1].set(params["bc"])

    # bf16 MXU operands (weights); biases stay f32.
    w1 = params["w1"].astype(jnp.bfloat16)
    w2 = params["w2"].astype(jnp.bfloat16)
    w3 = params["w3"].astype(jnp.bfloat16)
    w_head = w_head.astype(jnp.bfloat16)
    b1, b2, b3 = params["b1"], params["b2"], params["b3"]

    # --- pad batch to a multiple of the tile ----------------------------------
    nb = pl.cdiv(B, tile_b)
    b_pad = nb * tile_b
    if b_pad != B:
        x = jnp.pad(x, ((0, b_pad - B), (0, 0)))

    # Grid-resident spec for weights/biases (same block for every batch tile).
    resident = lambda arr: pl.BlockSpec(arr.shape, lambda i: (0, 0))

    flops = 2 * b_pad * (in_dim * HID1 + HID1 * HID2 + HID2 * HID3
                         + HID3 * HEAD_LANES)
    bytes_accessed = int(
        x.size * x.dtype.itemsize
        + sum(a.size * a.dtype.itemsize
              for a in (w1, b1, w2, b2, w3, b3, w_head, b_head))
        + b_pad * HEAD_LANES * 4)

    head = pl.pallas_call(
        ac_kernel,
        out_shape=jax.ShapeDtypeStruct((b_pad, HEAD_LANES), jnp.float32),
        grid=(nb,),
        in_specs=[
            pl.BlockSpec((tile_b, in_dim), lambda i: (i, 0)),   # x: batch-tiled
            resident(w1), resident(b1),
            resident(w2), resident(b2),
            resident(w3), resident(b3),
            resident(w_head), resident(b_head),
        ],
        out_specs=pl.BlockSpec((tile_b, HEAD_LANES), lambda i: (i, 0)),
        compiler_params=pltpu.CompilerParams(
            dimension_semantics=("parallel",)),
        cost_estimate=pl.CostEstimate(flops=flops, transcendentals=0,
                                      bytes_accessed=bytes_accessed),
    )(x, w1, b1, w2, b2, w3, b3, w_head, b_head)

    # Drop padded rows, split fused head, finish the (cheap) dim=0 softmax here
    # so batch tiles stay fully independent inside the kernel.
    head = head[:B]
    logits = head[:, :A]
    critic = head[:, A:A + 1]
    policy = jax.nn.softmax(logits, axis=0)        # F.softmax(..., dim=0)
    return policy, critic


def init_params(key, input_size, output_size):
    """Deterministic init.  Weights stored as [in, out] (PyTorch W.T)."""
    def linear(k, fan_in, fan_out):
        kw, kb = jax.random.split(k)
        bound = 1.0 / jnp.sqrt(fan_in)
        w = jax.random.uniform(kw, (fan_in, fan_out), jnp.float32, -bound, bound)
        b = jax.random.uniform(kb, (1, fan_out), jnp.float32, -bound, bound)
        return w, b

    k1, k2, k3, k4, k5 = jax.random.split(key, 5)
    w1, b1 = linear(k1, input_size, HID1)
    w2, b2 = linear(k2, HID1, HID2)
    w3, b3 = linear(k3, HID2, HID3)
    wa, ba = linear(k4, HID3, output_size)
    wc, bc = linear(k5, HID3, 1)
    return dict(w1=w1, b1=b1, w2=w2, b2=b2, w3=w3, b3=b3,
                wa=wa, ba=ba, wc=wc, bc=bc)


def _reference(x, p):
    h = jnp.maximum(x @ p["w1"] + p["b1"], 0.0)
    h = jnp.maximum(h @ p["w2"] + p["b2"], 0.0)
    h = jnp.maximum(h @ p["w3"] + p["b3"], 0.0)
    policy = jax.nn.softmax(h @ p["wa"] + p["ba"], axis=0)
    critic = h @ p["wc"] + p["bc"]
    return policy, critic


if __name__ == "__main__":
    # NOTE: the PyTorch forward() has no return statement (returns None); we
    # expose (policy_output, critic_output), the values it computes.
    input_size, output_size, batch = 32, 4, 8
    key = jax.random.PRNGKey(0)
    kx, kp = jax.random.split(key)

    x = jax.random.normal(kx, (batch, input_size), jnp.float32)
    params = init_params(kp, input_size, output_size)

    policy, critic = ac_forward(x, params)
    jax.block_until_ready((policy, critic))

    assert policy.shape == (batch, output_size)
    assert critic.shape == (batch, 1)
    # softmax over dim=0: each column of policy sums to 1
    assert jnp.allclose(jnp.sum(policy, axis=0), jnp.ones((output_size,)), atol=1e-5)
    # loose check vs an f32 reference (kernel uses bf16 MXU operands)
    ref_policy, ref_critic = _reference(x, params)
    assert jnp.allclose(policy, ref_policy, atol=1e-1)
    assert jnp.allclose(critic, ref_critic, atol=1e-1)
    print("KERNEL_OK")
</pallas_src>

<mosaic_0001>
module attributes {stable_mosaic.version = 11 : i64} {
  func.func @ac_kernel(%arg0: i32, %arg1: memref<128x32xf32, #tpu.memory_space<vmem>>, %arg2: memref<32x128xbf16, #tpu.memory_space<vmem>>, %arg3: memref<1x128xf32, #tpu.memory_space<vmem>>, %arg4: memref<128x256xbf16, #tpu.memory_space<vmem>>, %arg5: memref<1x256xf32, #tpu.memory_space<vmem>>, %arg6: memref<256x128xbf16, #tpu.memory_space<vmem>>, %arg7: memref<1x128xf32, #tpu.memory_space<vmem>>, %arg8: memref<128x128xbf16, #tpu.memory_space<vmem>>, %arg9: memref<1x128xf32, #tpu.memory_space<vmem>>, %arg10: memref<128x128xf32, #tpu.memory_space<vmem>>) attributes {dimension_semantics = [#tpu.dimension_semantics<parallel>], iteration_bounds = array<i64: 1>, scalar_prefetch = 0 : i64, scratch_operands = 0 : i64, tpu.core_type = #tpu.core_type<tc>, window_params = [{transform_indices = @transform_0, window_bounds = array<i64: 128, 32>}, {pipeline_mode = #tpu.pipeline_mode<synchronous>, transform_indices = @transform_1, window_bounds = array<i64: 32, 128>}, {pipeline_mode = #tpu.pipeline_mode<synchronous>, transform_indices = @transform_2, window_bounds = array<i64: 1, 128>}, {pipeline_mode = #tpu.pipeline_mode<synchronous>, transform_indices = @transform_3, window_bounds = array<i64: 128, 256>}, {pipeline_mode = #tpu.pipeline_mode<synchronous>, transform_indices = @transform_4, window_bounds = array<i64: 1, 256>}, {pipeline_mode = #tpu.pipeline_mode<synchronous>, transform_indices = @transform_5, window_bounds = array<i64: 256, 128>}, {pipeline_mode = #tpu.pipeline_mode<synchronous>, transform_indices = @transform_6, window_bounds = array<i64: 1, 128>}, {pipeline_mode = #tpu.pipeline_mode<synchronous>, transform_indices = @transform_7, window_bounds = array<i64: 128, 128>}, {pipeline_mode = #tpu.pipeline_mode<synchronous>, transform_indices = @transform_8, window_bounds = array<i64: 1, 128>}, {transform_indices = @transform_9, window_bounds = array<i64: 128, 128>}]} {
    %c0 = arith.constant 0 : index
    %c0_0 = arith.constant 0 : index
    %0 = vector.load %arg1[%c0, %c0_0] : memref<128x32xf32, #tpu.memory_space<vmem>>, vector<128x32xf32>
    %1 = arith.truncf %0 : vector<128x32xf32> to vector<128x32xbf16>
    %c0_1 = arith.constant 0 : index
    %c0_2 = arith.constant 0 : index
    %2 = vector.load %arg2[%c0_1, %c0_2] : memref<32x128xbf16, #tpu.memory_space<vmem>>, vector<32x128xbf16>
    %cst = arith.constant dense<0.000000e+00> : vector<128x128xf32>
    %3 = tpu.matmul %1, %2, %cst {dimension_numbers = #tpu.dot_dimension_numbers<[1], [0], [0], [1], [0, 0, 1, 1], [], []>} : vector<128x32xbf16>, vector<32x128xbf16>, vector<128x128xf32> -> vector<128x128xf32>
    %c0_3 = arith.constant 0 : index
    %c0_4 = arith.constant 0 : index
    %4 = vector.load %arg3[%c0_3, %c0_4] : memref<1x128xf32, #tpu.memory_space<vmem>>, vector<1x128xf32>
    %5 = vector.broadcast %4 : vector<1x128xf32> to vector<128x128xf32>
    %6 = arith.addf %3, %5 : vector<128x128xf32>
    %cst_5 = arith.constant 0.000000e+00 : f32
    %7 = vector.broadcast %cst_5 : f32 to vector<128x128xf32>
    %8 = arith.maximumf %6, %7 : vector<128x128xf32>
    %9 = arith.truncf %8 : vector<128x128xf32> to vector<128x128xbf16>
    %c0_6 = arith.constant 0 : index
    %c0_7 = arith.constant 0 : index
    %10 = vector.load %arg4[%c0_6, %c0_7] : memref<128x256xbf16, #tpu.memory_space<vmem>>, vector<128x256xbf16>
    %cst_8 = arith.constant dense<0.000000e+00> : vector<128x256xf32>
    %11 = tpu.matmul %9, %10, %cst_8 {dimension_numbers = #tpu.dot_dimension_numbers<[1], [0], [0], [1], [0, 0, 1, 1], [], []>} : vector<128x128xbf16>, vector<128x256xbf16>, vector<128x256xf32> -> vector<128x256xf32>
    %c0_9 = arith.constant 0 : index
    %c0_10 = arith.constant 0 : index
    %12 = vector.load %arg5[%c0_9, %c0_10] : memref<1x256xf32, #tpu.memory_space<vmem>>, vector<1x256xf32>
    %13 = vector.broadcast %12 : vector<1x256xf32> to vector<128x256xf32>
    %14 = arith.addf %11, %13 : vector<128x256xf32>
    %cst_11 = arith.constant 0.000000e+00 : f32
    %15 = vector.broadcast %cst_11 : f32 to vector<128x256xf32>
    %16 = arith.maximumf %14, %15 : vector<128x256xf32>
    %17 = arith.truncf %16 : vector<128x256xf32> to vector<128x256xbf16>
    %c0_12 = arith.constant 0 : index
    %c0_13 = arith.constant 0 : index
    %18 = vector.load %arg6[%c0_12, %c0_13] : memref<256x128xbf16, #tpu.memory_space<vmem>>, vector<256x128xbf16>
    %cst_14 = arith.constant dense<0.000000e+00> : vector<128x128xf32>
    %19 = tpu.matmul %17, %18, %cst_14 {dimension_numbers = #tpu.dot_dimension_numbers<[1], [0], [0], [1], [0, 0, 1, 1], [], []>} : vector<128x256xbf16>, vector<256x128xbf16>, vector<128x128xf32> -> vector<128x128xf32>
    %c0_15 = arith.constant 0 : index
    %c0_16 = arith.constant 0 : index
    %20 = vector.load %arg7[%c0_15, %c0_16] : memref<1x128xf32, #tpu.memory_space<vmem>>, vector<1x128xf32>
    %21 = vector.broadcast %20 : vector<1x128xf32> to vector<128x128xf32>
    %22 = arith.addf %19, %21 : vector<128x128xf32>
    %cst_17 = arith.constant 0.000000e+00 : f32
    %23 = vector.broadcast %cst_17 : f32 to vector<128x128xf32>
    %24 = arith.maximumf %22, %23 : vector<128x128xf32>
    %25 = arith.truncf %24 : vector<128x128xf32> to vector<128x128xbf16>
    %c0_18 = arith.constant 0 : index
    %c0_19 = arith.constant 0 : index
    %26 = vector.load %arg8[%c0_18, %c0_19] : memref<128x128xbf16, #tpu.memory_space<vmem>>, vector<128x128xbf16>
    %cst_20 = arith.constant dense<0.000000e+00> : vector<128x128xf32>
    %27 = tpu.matmul %25, %26, %cst_20 {dimension_numbers = #tpu.dot_dimension_numbers<[1], [0], [0], [1], [0, 0, 1, 1], [], []>} : vector<128x128xbf16>, vector<128x128xbf16>, vector<128x128xf32> -> vector<128x128xf32>
    %c0_21 = arith.constant 0 : index
    %c0_22 = arith.constant 0 : index
    %28 = vector.load %arg9[%c0_21, %c0_22] : memref<1x128xf32, #tpu.memory_space<vmem>>, vector<1x128xf32>
    %29 = vector.broadcast %28 : vector<1x128xf32> to vector<128x128xf32>
    %30 = arith.addf %27, %29 : vector<128x128xf32>
    %c0_23 = arith.constant 0 : index
    %c0_24 = arith.constant 0 : index
    %31 = vector.load %arg10[%c0_23, %c0_24] : memref<128x128xf32, #tpu.memory_space<vmem>>, vector<128x128xf32>
    tpu.vector_store %arg10[%c0_23, %c0_24], %30 {strides = array<i32>} : memref<128x128xf32, #tpu.memory_space<vmem>>, vector<128x128xf32>,
    return
  }
  func.func @transform_0(%arg0: i32) -> (i32, i32) {
    %c0_i32 = arith.constant 0 : i32
    %c0_i32_0 = arith.constant 0 : i32
    return %arg0, %c0_i32 : i32, i32
  }
  func.func @transform_1(%arg0: i32) -> (i32, i32) {
    %c0_i32 = arith.constant 0 : i32
    %c0_i32_0 = arith.constant 0 : i32
    %c0_i32_1 = arith.constant 0 : i32
    return %c0_i32, %c0_i32_0 : i32, i32
  }
  func.func @transform_2(%arg0: i32) -> (i32, i32) {
    %c0_i32 = arith.constant 0 : i32
    %c0_i32_0 = arith.constant 0 : i32
    %c0_i32_1 = arith.constant 0 : i32
    return %c0_i32, %c0_i32_0 : i32, i32
  }
  func.func @transform_3(%arg0: i32) -> (i32, i32) {
    %c0_i32 = arith.constant 0 : i32
    %c0_i32_0 = arith.constant 0 : i32
    %c0_i32_1 = arith.constant 0 : i32
    return %c0_i32, %c0_i32_0 : i32, i32
  }
  func.func @transform_4(%arg0: i32) -> (i32, i32) {
    %c0_i32 = arith.constant 0 : i32
    %c0_i32_0 = arith.constant 0 : i32
    %c0_i32_1 = arith.constant 0 : i32
    return %c0_i32, %c0_i32_0 : i32, i32
  }
  func.func @transform_5(%arg0: i32) -> (i32, i32) {
    %c0_i32 = arith.constant 0 : i32
    %c0_i32_0 = arith.constant 0 : i32
    %c0_i32_1 = arith.constant 0 : i32
    return %c0_i32, %c0_i32_0 : i32, i32
  }
  func.func @transform_6(%arg0: i32) -> (i32, i32) {
    %c0_i32 = arith.constant 0 : i32
    %c0_i32_0 = arith.constant 0 : i32
    %c0_i32_1 = arith.constant 0 : i32
    return %c0_i32, %c0_i32_0 : i32, i32
  }
  func.func @transform_7(%arg0: i32) -> (i32, i32) {
    %c0_i32 = arith.constant 0 : i32
    %c0_i32_0 = arith.constant 0 : i32
    %c0_i32_1 = arith.constant 0 : i32
    return %c0_i32, %c0_i32_0 : i32, i32
  }
  func.func @transform_8(%arg0: i32) -> (i32, i32) {
    %c0_i32 = arith.constant 0 : i32
    %c0_i32_0 = arith.constant 0 : i32
    %c0_i32_1 = arith.constant 0 : i32
    return %c0_i32, %c0_i32_0 : i32, i32
  }
  func.func @transform_9(%arg0: i32) -> (i32, i32) {
    %c0_i32 = arith.constant 0 : i32
    %c0_i32_0 = arith.constant 0 : i32
    return %arg0, %c0_i32 : i32, i32
  }
}

</mosaic_0001>

<llo_original>
// kernel: tpu_custom_call.1
$region0: #{tpu_custom_call.1}
  #allocation0 [shape = 'u32[]', space=smem, size = 0x4, offset = 0x4, fixed_abs, tag = 'smem constant byte address 0x4 - core index']
  #allocation1 [shape = 'u32[144,128]{1,0:T(1,128)}', space=vmem, size = 0x12000, scoped, tag = 'internal scratch']
  %s0 = inlined_call_operand.vmem [shape: f32[128,32], index: 0, kind: input, shape index: {}]
  %s1 = inlined_call_operand.vmem [shape: bf16[32,128], index: 1, kind: input, shape index: {}]
  %s2 = inlined_call_operand.vmem [shape: f32[1,128], index: 2, kind: input, shape index: {}]
  %s3 = inlined_call_operand.vmem [shape: bf16[128,256], index: 3, kind: input, shape index: {}]
  %s4 = inlined_call_operand.vmem [shape: f32[1,256], index: 4, kind: input, shape index: {}]
  %s5 = inlined_call_operand.hbm [shape: bf16[256,128], index: 5, kind: input, shape index: {}]
  %s6 = inlined_call_operand.vmem [shape: f32[1,128], index: 6, kind: input, shape index: {}]
  %s7 = inlined_call_operand.hbm [shape: bf16[128,128], index: 7, kind: input, shape index: {}]
  %s8 = inlined_call_operand.vmem [shape: f32[1,128], index: 8, kind: input, shape index: {}]
  %s9 = inlined_call_operand.hbm [shape: f32[128,128], index: 9, kind: output, shape index: {}]
  %s10 = sld [smem:[#allocation0]]
  $region54: #{tpu_custom_call.1} parent=0
    _
  %s12 = ssub.s32 1, %s10
  %s13 = scalar_select 0, %s12, %s10
  $region1: #{tpu_custom_call.1} parent=0
    #allocation2 [shape = 'u8[65536]{0}', space=vmem, size = 0x10000, scoped, tag = 'input window, operand 5, single buffered']
    #allocation3 [shape = 's32[1]{0}', space=sflag, size = 0x4, scoped, tag = 'scoped memory for tpu_custom_call.1']
    #allocation4 [shape = 's32[1]{0}', space=sflag, size = 0x4, scoped, tag = 'scoped memory for tpu_custom_call.1']
    #allocation5 [shape = 'u8[32768]{0}', space=vmem, size = 0x8000, scoped, tag = 'input window, operand 7, single buffered']
    #allocation6 [shape = 's32[1]{0}', space=sflag, size = 0x4, scoped, tag = 'scoped memory for tpu_custom_call.1']
    #allocation7 [shape = 'u8[65536]{0}', space=vmem, size = 0x10000, scoped, tag = 'output window, operand 0, single buffered']
    %14 = vsyncpa [#allocation3], 0
    %15 = vsyncpa [#allocation6], 0
    %16 = vsyncpa [#allocation4], 0
    // Predicated region
    $region2: #{tpu_custom_call.1} parent=1 // pred_check
      _
    $region3: #{tpu_custom_call.1} parent=1 // pred_check_branch
      %18 = sbr.rel (0) target = $region5
    $region4: #{tpu_custom_call.1} parent=1 // pred_region
      _
    $region5: #{tpu_custom_call.1} parent=1 // pred_fallthru
      _
    // Predicated region
    $region6: #{tpu_custom_call.1} parent=1 // pred_check
      _
    $region7: #{tpu_custom_call.1} parent=1 // pred_check_branch
      %20 = sbr.rel (0) target = $region9
    $region8: #{tpu_custom_call.1} parent=1 // pred_region
      _
    $region9: #{tpu_custom_call.1} parent=1 // pred_fallthru
      _
    // Predicated region
    $region10: #{tpu_custom_call.1} parent=1 // pred_check
      _
    $region11: #{tpu_custom_call.1} parent=1 // pred_check_branch
      %22 = sbr.rel (0) target = $region13
    $region12: #{tpu_custom_call.1} parent=1 // pred_region
      _
    $region13: #{tpu_custom_call.1} parent=1 // pred_fallthru
      _
    // Predicated region
    $region14: #{tpu_custom_call.1} parent=1 // pred_check
      _
    $region15: #{tpu_custom_call.1} parent=1 // pred_check_branch
      %24 = sbr.rel (0) target = $region17
    $region16: #{tpu_custom_call.1} parent=1 // pred_region
      _
    $region17: #{tpu_custom_call.1} parent=1 // pred_fallthru
      _
    // Predicated region
    $region18: #{tpu_custom_call.1} parent=1 // pred_check
      _
    $region19: #{tpu_custom_call.1} parent=1 // pred_check_branch
      %26 = sbr.rel (0) target = $region21
    $region20: #{tpu_custom_call.1} parent=1 // pred_region
      _
    $region21: #{tpu_custom_call.1} parent=1 // pred_fallthru
      _
    // Predicated region
    $region22: #{tpu_custom_call.1} parent=1 // pred_check
      _
    $region23: #{tpu_custom_call.1} parent=1 // pred_check_branch
      %28 = sbr.rel (0) target = $region25
    $region24: #{tpu_custom_call.1} parent=1 // pred_region
      %s30 = ssub.s32 2048, 2048
      %31 = vsyncadd [#allocation3], %s30
      %s32 = sshll.u32 [#allocation2], 4
      %s33 = int_to_ptr.vmem [resolvable:$true] %s32
      %38 = dma.hbm_to_vmem [thread:$0]  %s5, 2048, %s33, [#allocation3], 64, 64, 4
    $region25: #{tpu_custom_call.1} parent=1 // pred_fallthru
      _
    // Predicated region
    $region26: #{tpu_custom_call.1} parent=1 // pred_check
      _
    $region27: #{tpu_custom_call.1} parent=1 // pred_check_branch
      %40 = sbr.rel (0) target = $region29
    $region28: #{tpu_custom_call.1} parent=1 // pred_region
      _
    $region29: #{tpu_custom_call.1} parent=1 // pred_fallthru
      _
    // Predicated region
    $region30: #{tpu_custom_call.1} parent=1 // pred_check
      _
    $region31: #{tpu_custom_call.1} parent=1 // pred_check_branch
      %42 = sbr.rel (0) target = $region33
    $region32: #{tpu_custom_call.1} parent=1 // pred_region
      %s44 = ssub.s32 1024, 1024
      %45 = vsyncadd [#allocation6], %s44
      %s46 = sshll.u32 [#allocation5], 4
      %s47 = int_to_ptr.vmem [resolvable:$true] %s46
      %52 = dma.hbm_to_vmem [thread:$0]  %s7, 1024, %s47, [#allocation6], 64, 64, 4
    $region33: #{tpu_custom_call.1} parent=1 // pred_fallthru
      _
    // Predicated region
    $region34: #{tpu_custom_call.1} parent=1 // pred_check
      _
    $region35: #{tpu_custom_call.1} parent=1 // pred_check_branch
      %54 = sbr.rel (0) target = $region37
    $region36: #{tpu_custom_call.1} parent=1 // pred_region
      _
    $region37: #{tpu_custom_call.1} parent=1 // pred_fallthru
      _
    // Predicated region
    $region38: #{tpu_custom_call.1} parent=1 // pred_check
      _
    $region39: #{tpu_custom_call.1} parent=1 // pred_check_branch
      %56 = sbr.rel (0) target = $region41
    $region40: #{tpu_custom_call.1} parent=1 // pred_region
      %57 = dma.done [#allocation3], 2048
    $region41: #{tpu_custom_call.1} parent=1 // pred_fallthru
      _
    // Predicated region
    $region42: #{tpu_custom_call.1} parent=1 // pred_check
      _
    $region43: #{tpu_custom_call.1} parent=1 // pred_check_branch
      %59 = sbr.rel (0) target = $region45
    $region44: #{tpu_custom_call.1} parent=1 // pred_region
      %60 = dma.done [#allocation6], 1024
    $region45: #{tpu_custom_call.1} parent=1 // pred_fallthru
      _
    %v62 = vld [vmem:[%s0] sm:$0xff]
    %v63 = vld [vmem:[%s0 + $0x8] sm:$0xff]
    %v64 = vld [vmem:[%s0 + $0x10] sm:$0xff]
    %v65 = vld [vmem:[%s0 + $0x18] sm:$0xff]
    %v66 = vld [vmem:[%s0 + $0x20] sm:$0xff]
    %v67 = vld [vmem:[%s0 + $0x28] sm:$0xff]
    %v68 = vld [vmem:[%s0 + $0x30] sm:$0xff]
    %v69 = vld [vmem:[%s0 + $0x38] sm:$0xff]
    %v70 = vld [vmem:[%s0 + $0x40] sm:$0xff]
    %v71 = vld [vmem:[%s0 + $0x48] sm:$0xff]
    %v72 = vld [vmem:[%s0 + $0x50] sm:$0xff]
    %v73 = vld [vmem:[%s0 + $0x58] sm:$0xff]
    %v74 = vld [vmem:[%s0 + $0x60] sm:$0xff]
    %v75 = vld [vmem:[%s0 + $0x68] sm:$0xff]
    %v76 = vld [vmem:[%s0 + $0x70] sm:$0xff]
    %v77 = vld [vmem:[%s0 + $0x78] sm:$0xff]
    %v78 = vpack.c.bf16 %v63, %v62
    %v79 = vpack.c.bf16 %v65, %v64
    %v80 = vpack.c.bf16 %v67, %v66
    %v81 = vpack.c.bf16 %v69, %v68
    %v82 = vpack.c.bf16 %v71, %v70
    %v83 = vpack.c.bf16 %v73, %v72
    %v84 = vpack.c.bf16 %v75, %v74
    %v85 = vpack.c.bf16 %v77, %v76
    %v86 = vld [vmem:[%s1] sm:$0xf]
    %v87 = vld [vmem:[%s1 + $0x4] sm:$0xf]
    %v88 = vld [vmem:[%s1 + $0x8] sm:$0xf]
    %v89 = vld [vmem:[%s1 + $0xc] sm:$0xf]
    %v90 = vld [vmem:[%s2] sm:$0x1]
    %v92 = vlaneseq
    %v93 = vshrl.u32 %v92, 7
    %v94 = vsub.s32 0, %v93
    %v95 = vrot.slane %v90, %v94
    %v101 = vunpack.c.l.b16 %v86
    %v102 = vunpack.c.l.b16 %v87
    %v103 = vunpack.c.l.b16 %v88
    %v104 = vunpack.c.l.b16 %v89
    %v105 = vpack.c.b16 %v102, %v101
    %v106 = vpack.c.b16 %v104, %v103
    %vm109 = vcmask 261120
    %v111 = vsel %vm109, %v78, 0
    %v114 = vsel %vm109, %v79, 0
    %v117 = vsel %vm109, %v80, 0
    %v120 = vsel %vm109, %v81, 0
    %v123 = vsel %vm109, %v82, 0
    %v126 = vsel %vm109, %v83, 0
    %v129 = vsel %vm109, %v84, 0
    %v132 = vsel %vm109, %v85, 0
    %134 = vmatprep.subr.bf16.mxu0 0
    %135 = vmatpush1.bf16.msra.mxu0 0
    %136 = vmatprep.subr.bf16.mxu0 0
    %137 = vmatpush1.bf16.msra.mxu0 0
    %138 = vmatprep.subr.bf16.mxu0 0
    %139 = vmatpush1.bf16.msra.mxu0 0
    %140 = vmatprep.subr.bf16.mxu0 0
    %141 = vmatpush1.bf16.msra.mxu0 0
    %142 = vmatprep.subr.bf16.mxu0 0
    %143 = vmatpush1.bf16.msra.mxu0 0
    %144 = vmatprep.subr.bf16.mxu0 0
    %145 = vmatpush1.bf16.msra.mxu0 0
    %146 = vmatprep.subr.bf16.mxu0 0
    %147 = vmatpush1.bf16.msra.mxu0 %v106
    %148 = vmatprep.subr.bf16.mxu0 0
    %149 = vmatpush1.bf16.msra.mxu0 %v105
    %150 = vmatprep.subr.bf16.mxu0 0
    %151 = vmatpush2.bf16.msra.mxu0 0
    %152 = vmatprep.subr.bf16.mxu0 0
    %153 = vmatpush2.bf16.msra.mxu0 0
    %154 = vmatprep.subr.bf16.mxu0 0
    %155 = vmatpush2.bf16.msra.mxu0 0
    %156 = vmatprep.subr.bf16.mxu0 0
    %157 = vmatpush2.bf16.msra.mxu0 0
    %158 = vmatprep.subr.bf16.mxu0 0
    %159 = vmatpush2.bf16.msra.mxu0 0
    %160 = vmatprep.subr.bf16.mxu0 0
    %161 = vmatpush2.bf16.msra.mxu0 0
    %162 = vmatprep.subr.bf16.mxu0 0
    %163 = vmatpush2.bf16.msra.mxu0 0
    %164 = vmatprep.subr.bf16.mxu0 0
    %165 = vmatpush2.bf16.msra.mxu0 0
    %166 = vmatprep.mubr.bf16.mxu0 0
    %167 = vmatmul.mubr.bf16.gmra.mxu0 %v111
    %v168 = vpop.f32.mrf.mxu0
    %v169 = vadd.f32 %v95, %v168
    %v170 = vpop.f32.mrf.mxu0
    %v171 = vpop.f32.mrf.mxu0
    %v172 = vadd.f32 %v95, %v171
    %v173 = vpop.f32.mrf.mxu0
    %174 = vmatprep.mubr.bf16.mxu0 0
    %175 = vmatmul.mubr.bf16.gmra.mxu0 %v114
    %v176 = vpop.f32.mrf.mxu0
    %v177 = vadd.f32 %v95, %v176
    %v178 = vpop.f32.mrf.mxu0
    %v179 = vpop.f32.mrf.mxu0
    %v180 = vadd.f32 %v95, %v179
    %v181 = vpop.f32.mrf.mxu0
    %182 = vmatprep.mubr.bf16.mxu0 0
    %183 = vmatmul.mubr.bf16.gmra.mxu0 %v117
    %v184 = vpop.f32.mrf.mxu0
    %v185 = vadd.f32 %v95, %v184
    %v186 = vpop.f32.mrf.mxu0
    %v187 = vpop.f32.mrf.mxu0
    %v188 = vadd.f32 %v95, %v187
    %v189 = vpop.f32.mrf.mxu0
    %190 = vmatprep.mubr.bf16.mxu0 0
    %191 = vmatmul.mubr.bf16.gmra.mxu0 %v120
    %v192 = vpop.f32.mrf.mxu0
    %v193 = vadd.f32 %v95, %v192
    %v194 = vpop.f32.mrf.mxu0
    %v195 = vpop.f32.mrf.mxu0
    %v196 = vadd.f32 %v95, %v195
    %v197 = vpop.f32.mrf.mxu0
    %198 = vmatprep.mubr.bf16.mxu0 0
    %199 = vmatmul.mubr.bf16.gmra.mxu0 %v123
    %v200 = vpop.f32.mrf.mxu0
    %v201 = vadd.f32 %v95, %v200
    %v202 = vpop.f32.mrf.mxu0
    %v203 = vpop.f32.mrf.mxu0
    %v204 = vadd.f32 %v95, %v203
    %v205 = vpop.f32.mrf.mxu0
    %206 = vmatprep.mubr.bf16.mxu0 0
    %207 = vmatmul.mubr.bf16.gmra.mxu0 %v126
    %v208 = vpop.f32.mrf.mxu0
    %v209 = vadd.f32 %v95, %v208
    %v210 = vpop.f32.mrf.mxu0
    %v211 = vpop.f32.mrf.mxu0
    %v212 = vadd.f32 %v95, %v211
    %v213 = vpop.f32.mrf.mxu0
    %214 = vmatprep.mubr.bf16.mxu0 0
    %215 = vmatmul.mubr.bf16.gmra.mxu0 %v129
    %v216 = vpop.f32.mrf.mxu0
    %v217 = vadd.f32 %v95, %v216
    %v218 = vpop.f32.mrf.mxu0
    %v219 = vpop.f32.mrf.mxu0
    %v220 = vadd.f32 %v95, %v219
    %v221 = vpop.f32.mrf.mxu0
    %222 = vmatprep.mubr.bf16.mxu0 0
    %223 = vmatmul.mubr.bf16.gmra.mxu0 %v132
    %v224 = vpop.f32.mrf.mxu0
    %v225 = vadd.f32 %v95, %v224
    %v226 = vpop.f32.mrf.mxu0
    %v227 = vpop.f32.mrf.mxu0
    %v228 = vadd.f32 %v95, %v227
    %v229 = vpop.f32.mrf.mxu0
    %230 = vdwg.mxu0
    %v231 = vmax.f32 %v169, 0.0
    %v232 = vmax.f32 %v172, 0.0
    %v233 = vmax.f32 %v177, 0.0
    %v234 = vmax.f32 %v180, 0.0
    %v235 = vmax.f32 %v185, 0.0
    %v236 = vmax.f32 %v188, 0.0
    %v237 = vmax.f32 %v193, 0.0
    %v238 = vmax.f32 %v196, 0.0
    %v239 = vmax.f32 %v201, 0.0
    %v240 = vmax.f32 %v204, 0.0
    %v241 = vmax.f32 %v209, 0.0
    %v242 = vmax.f32 %v212, 0.0
    %v243 = vmax.f32 %v217, 0.0
    %v244 = vmax.f32 %v220, 0.0
    %v245 = vmax.f32 %v225, 0.0
    %v246 = vmax.f32 %v228, 0.0
    %v247 = vpack.c.bf16 %v232, %v231
    %v248 = vpack.c.bf16 %v234, %v233
    %v249 = vpack.c.bf16 %v236, %v235
    %v250 = vpack.c.bf16 %v238, %v237
    %v251 = vpack.c.bf16 %v240, %v239
    %v252 = vpack.c.bf16 %v242, %v241
    %v253 = vpack.c.bf16 %v244, %v243
    %v254 = vpack.c.bf16 %v246, %v245
    %v255 = vld [vmem:[%s3] sm:$0xff]
    %v256 = vld [vmem:[%s3 + $0x8] sm:$0xff]
    %v257 = vld [vmem:[%s3 + $0x10] sm:$0xff]
    %v258 = vld [vmem:[%s3 + $0x18] sm:$0xff]
    %v259 = vld [vmem:[%s3 + $0x20] sm:$0xff]
    %v260 = vld [vmem:[%s3 + $0x28] sm:$0xff]
    %v261 = vld [vmem:[%s3 + $0x30] sm:$0xff]
    %v262 = vld [vmem:[%s3 + $0x38] sm:$0xff]
    %v263 = vld [vmem:[%s3 + $0x40] sm:$0xff]
    %v264 = vld [vmem:[%s3 + $0x48] sm:$0xff]
    %v265 = vld [vmem:[%s3 + $0x50] sm:$0xff]
    %v266 = vld [vmem:[%s3 + $0x58] sm:$0xff]
    %v267 = vld [vmem:[%s3 + $0x60] sm:$0xff]
    %v268 = vld [vmem:[%s3 + $0x68] sm:$0xff]
    %v269 = vld [vmem:[%s3 + $0x70] sm:$0xff]
    %v270 = vld [vmem:[%s3 + $0x78] sm:$0xff]
    %v271 = vld [vmem:[%s4] sm:$0x3]
    %v273 = vlaneseq
    %v274 = vshrl.u32 %v273, 7
    %v275 = vsub.s32 0, %v274
    %v276 = vrot.slane %v271, %v275
    %v277 = vlaneseq
    %v278 = vshrl.u32 %v277, 7
    %v279 = vsub.s32 1, %v278
    %v280 = vrot.slane %v271, %v279
    %v299 = vunpack.c.l.b16 %v255
    %v300 = vunpack.c.h.b16 %v255
    %v301 = vunpack.c.l.b16 %v256
    %v302 = vunpack.c.h.b16 %v256
    %v303 = vunpack.c.l.b16 %v257
    %v304 = vunpack.c.h.b16 %v257
    %v305 = vunpack.c.l.b16 %v258
    %v306 = vunpack.c.h.b16 %v258
    %v307 = vunpack.c.l.b16 %v259
    %v308 = vunpack.c.h.b16 %v259
    %v309 = vunpack.c.l.b16 %v260
    %v310 = vunpack.c.h.b16 %v260
    %v311 = vunpack.c.l.b16 %v261
    %v312 = vunpack.c.h.b16 %v261
    %v313 = vunpack.c.l.b16 %v262
    %v314 = vunpack.c.h.b16 %v262
    %v315 = vunpack.c.l.b16 %v263
    %v316 = vunpack.c.h.b16 %v263
    %v317 = vunpack.c.l.b16 %v264
    %v318 = vunpack.c.h.b16 %v264
    %v319 = vunpack.c.l.b16 %v265
    %v320 = vunpack.c.h.b16 %v265
    %v321 = vunpack.c.l.b16 %v266
    %v322 = vunpack.c.h.b16 %v266
    %v323 = vunpack.c.l.b16 %v267
    %v324 = vunpack.c.h.b16 %v267
    %v325 = vunpack.c.l.b16 %v268
    %v326 = vunpack.c.h.b16 %v268
    %v327 = vunpack.c.l.b16 %v269
    %v328 = vunpack.c.h.b16 %v269
    %v329 = vunpack.c.l.b16 %v270
    %v330 = vunpack.c.h.b16 %v270
    %v331 = vpack.c.b16 %v301, %v299
    %v332 = vpack.c.b16 %v302, %v300
    %v333 = vpack.c.b16 %v305, %v303
    %v334 = vpack.c.b16 %v306, %v304
    %v335 = vpack.c.b16 %v309, %v307
    %v336 = vpack.c.b16 %v310, %v308
    %v337 = vpack.c.b16 %v313, %v311
    %v338 = vpack.c.b16 %v314, %v312
    %v339 = vpack.c.b16 %v317, %v315
    %v340 = vpack.c.b16 %v318, %v316
    %v341 = vpack.c.b16 %v321, %v319
    %v342 = vpack.c.b16 %v322, %v320
    %v343 = vpack.c.b16 %v325, %v323
    %v344 = vpack.c.b16 %v326, %v324
    %v345 = vpack.c.b16 %v329, %v327
    %v346 = vpack.c.b16 %v330, %v328
    %363 = vmatprep.subr.bf16.mxu0 %v346
    %364 = vmatpush1.bf16.msra.mxu0 %v345
    %365 = vmatprep.subr.bf16.mxu0 %v344
    %366 = vmatpush1.bf16.msra.mxu0 %v343
    %367 = vmatprep.subr.bf16.mxu0 %v342
    %368 = vmatpush1.bf16.msra.mxu0 %v341
    %369 = vmatprep.subr.bf16.mxu0 %v340
    %370 = vmatpush1.bf16.msra.mxu0 %v339
    %371 = vmatprep.subr.bf16.mxu0 %v338
    %372 = vmatpush1.bf16.msra.mxu0 %v337
    %373 = vmatprep.subr.bf16.mxu0 %v336
    %374 = vmatpush1.bf16.msra.mxu0 %v335
    %375 = vmatprep.subr.bf16.mxu0 %v334
    %376 = vmatpush1.bf16.msra.mxu0 %v333
    %377 = vmatprep.subr.bf16.mxu0 %v332
    %378 = vmatpush1.bf16.msra.mxu0 %v331
    %379 = vmatprep.subr.bf16.mxu0 0
    %380 = vmatpush2.bf16.msra.mxu0 0
    %381 = vmatprep.subr.bf16.mxu0 0
    %382 = vmatpush2.bf16.msra.mxu0 0
    %383 = vmatprep.subr.bf16.mxu0 0
    %384 = vmatpush2.bf16.msra.mxu0 0
    %385 = vmatprep.subr.bf16.mxu0 0
    %386 = vmatpush2.bf16.msra.mxu0 0
    %387 = vmatprep.subr.bf16.mxu0 0
    %388 = vmatpush2.bf16.msra.mxu0 0
    %389 = vmatprep.subr.bf16.mxu0 0
    %390 = vmatpush2.bf16.msra.mxu0 0
    %391 = vmatprep.subr.bf16.mxu0 0
    %392 = vmatpush2.bf16.msra.mxu0 0
    %393 = vmatprep.subr.bf16.mxu0 0
    %394 = vmatpush2.bf16.msra.mxu0 0
    %395 = vmatprep.mubr.bf16.mxu0 0
    %396 = vmatmul.mubr.bf16.gmra.mxu0 %v247
    %v397 = vpop.f32.mrf.mxu0
    %v398 = vadd.f32 %v276, %v397
    %v399 = vpop.f32.mrf.mxu0
    %v400 = vadd.f32 %v280, %v399
    %v401 = vpop.f32.mrf.mxu0
    %v402 = vadd.f32 %v276, %v401
    %v403 = vpop.f32.mrf.mxu0
    %v404 = vadd.f32 %v280, %v403
    %405 = vmatprep.mubr.bf16.mxu0 0
    %406 = vmatmul.mubr.bf16.gmra.mxu0 %v248
    %v407 = vpop.f32.mrf.mxu0
    %v408 = vadd.f32 %v276, %v407
    %v409 = vpop.f32.mrf.mxu0
    %v410 = vadd.f32 %v280, %v409
    %v411 = vpop.f32.mrf.mxu0
    %v412 = vadd.f32 %v276, %v411
    %v413 = vpop.f32.mrf.mxu0
    %v414 = vadd.f32 %v280, %v413
    %415 = vmatprep.mubr.bf16.mxu0 0
    %416 = vmatmul.mubr.bf16.gmra.mxu0 %v249
    %v417 = vpop.f32.mrf.mxu0
    %v418 = vadd.f32 %v276, %v417
    %v419 = vpop.f32.mrf.mxu0
    %v420 = vadd.f32 %v280, %v419
    %v421 = vpop.f32.mrf.mxu0
    %v422 = vadd.f32 %v276, %v421
    %v423 = vpop.f32.mrf.mxu0
    %v424 = vadd.f32 %v280, %v423
    %425 = vmatprep.mubr.bf16.mxu0 0
    %426 = vmatmul.mubr.bf16.gmra.mxu0 %v250
    %v427 = vpop.f32.mrf.mxu0
    %v428 = vadd.f32 %v276, %v427
    %v429 = vpop.f32.mrf.mxu0
    %v430 = vadd.f32 %v280, %v429
    %v431 = vpop.f32.mrf.mxu0
    %v432 = vadd.f32 %v276, %v431
    %v433 = vpop.f32.mrf.mxu0
    %v434 = vadd.f32 %v280, %v433
    %435 = vmatprep.mubr.bf16.mxu0 0
    %436 = vmatmul.mubr.bf16.gmra.mxu0 %v251
    %v437 = vpop.f32.mrf.mxu0
    %v438 = vadd.f32 %v276, %v437
    %v439 = vpop.f32.mrf.mxu0
    %v440 = vadd.f32 %v280, %v439
    %v441 = vpop.f32.mrf.mxu0
    %v442 = vadd.f32 %v276, %v441
    %v443 = vpop.f32.mrf.mxu0
    %v444 = vadd.f32 %v280, %v443
    %445 = vmatprep.mubr.bf16.mxu0 0
    %446 = vmatmul.mubr.bf16.gmra.mxu0 %v252
    %v447 = vpop.f32.mrf.mxu0
    %v448 = vadd.f32 %v276, %v447
    %v449 = vpop.f32.mrf.mxu0
    %v450 = vadd.f32 %v280, %v449
    %v451 = vpop.f32.mrf.mxu0
    %v452 = vadd.f32 %v276, %v451
    %v453 = vpop.f32.mrf.mxu0
    %v454 = vadd.f32 %v280, %v453
    %455 = vmatprep.mubr.bf16.mxu0 0
    %456 = vmatmul.mubr.bf16.gmra.mxu0 %v253
    %v457 = vpop.f32.mrf.mxu0
    %v458 = vadd.f32 %v276, %v457
    %v459 = vpop.f32.mrf.mxu0
    %v460 = vadd.f32 %v280, %v459
    %v461 = vpop.f32.mrf.mxu0
    %v462 = vadd.f32 %v276, %v461
    %v463 = vpop.f32.mrf.mxu0
    %v464 = vadd.f32 %v280, %v463
    %465 = vmatprep.mubr.bf16.mxu0 0
    %466 = vmatmul.mubr.bf16.gmra.mxu0 %v254
    %v467 = vpop.f32.mrf.mxu0
    %v468 = vadd.f32 %v276, %v467
    %v469 = vpop.f32.mrf.mxu0
    %v470 = vadd.f32 %v280, %v469
    %v471 = vpop.f32.mrf.mxu0
    %v472 = vadd.f32 %v276, %v471
    %v473 = vpop.f32.mrf.mxu0
    %v474 = vadd.f32 %v280, %v473
    %475 = vdwg.mxu0
    %v476 = vmax.f32 %v398, 0.0
    %v477 = vmax.f32 %v400, 0.0
    %v478 = vmax.f32 %v402, 0.0
    %v479 = vmax.f32 %v404, 0.0
    %v480 = vmax.f32 %v408, 0.0
    %v481 = vmax.f32 %v410, 0.0
    %v482 = vmax.f32 %v412, 0.0
    %v483 = vmax.f32 %v414, 0.0
    %v484 = vmax.f32 %v418, 0.0
    %v485 = vmax.f32 %v420, 0.0
    %v486 = vmax.f32 %v422, 0.0
    %v487 = vmax.f32 %v424, 0.0
    %v488 = vmax.f32 %v428, 0.0
    %v489 = vmax.f32 %v430, 0.0
    %v490 = vmax.f32 %v432, 0.0
    %v491 = vmax.f32 %v434, 0.0
    %v492 = vmax.f32 %v438, 0.0
    %v493 = vmax.f32 %v440, 0.0
    %v494 = vmax.f32 %v442, 0.0
    %v495 = vmax.f32 %v444, 0.0
    %v496 = vmax.f32 %v448, 0.0
    %v497 = vmax.f32 %v450, 0.0
    %v498 = vmax.f32 %v452, 0.0
    %v499 = vmax.f32 %v454, 0.0
    %v500 = vmax.f32 %v458, 0.0
    %v501 = vmax.f32 %v460, 0.0
    %v502 = vmax.f32 %v462, 0.0
    %v503 = vmax.f32 %v464, 0.0
    %v504 = vmax.f32 %v468, 0.0
    %v505 = vmax.f32 %v470, 0.0
    %v506 = vmax.f32 %v472, 0.0
    %v507 = vmax.f32 %v474, 0.0
    %v508 = vpack.c.bf16 %v478, %v476
    %v509 = vpack.c.bf16 %v479, %v477
    %v510 = vpack.c.bf16 %v482, %v480
    %v511 = vpack.c.bf16 %v483, %v481
    %v512 = vpack.c.bf16 %v486, %v484
    %v513 = vpack.c.bf16 %v487, %v485
    %v514 = vpack.c.bf16 %v490, %v488
    %v515 = vpack.c.bf16 %v491, %v489
    %v516 = vpack.c.bf16 %v494, %v492
    %v517 = vpack.c.bf16 %v495, %v493
    %v518 = vpack.c.bf16 %v498, %v496
    %v519 = vpack.c.bf16 %v499, %v497
    %v520 = vpack.c.bf16 %v502, %v500
    %v521 = vpack.c.bf16 %v503, %v501
    %v522 = vpack.c.bf16 %v506, %v504
    %v523 = vpack.c.bf16 %v507, %v505
    %v524 = vld [vmem:[#allocation2] sm:$0xf]
    %v525 = vld [vmem:[#allocation2 + $0x4] sm:$0xf]
    %v526 = vld [vmem:[#allocation2 + $0x8] sm:$0xf]
    %v527 = vld [vmem:[#allocation2 + $0xc] sm:$0xf]
    %v528 = vld [vmem:[#allocation2 + $0x10] sm:$0xf]
    %v529 = vld [vmem:[#allocation2 + $0x14] sm:$0xf]
    %v530 = vld [vmem:[#allocation2 + $0x18] sm:$0xf]
    %v531 = vld [vmem:[#allocation2 + $0x1c] sm:$0xf]
    %v532 = vld [vmem:[#allocation2 + $0x20] sm:$0xf]
    %v533 = vld [vmem:[#allocation2 + $0x24] sm:$0xf]
    %v534 = vld [vmem:[#allocation2 + $0x28] sm:$0xf]
    %v535 = vld [vmem:[#allocation2 + $0x2c] sm:$0xf]
    %v536 = vld [vmem:[#allocation2 + $0x30] sm:$0xf]
    %v537 = vld [vmem:[#allocation2 + $0x34] sm:$0xf]
    %v538 = vld [vmem:[#allocation2 + $0x38] sm:$0xf]
    %v539 = vld [vmem:[#allocation2 + $0x3c] sm:$0xf]
    %v540 = vld [vmem:[#allocation2 + $0x40] sm:$0xf]
    %v541 = vld [vmem:[#allocation2 + $0x44] sm:$0xf]
    %v542 = vld [vmem:[#allocation2 + $0x48] sm:$0xf]
    %v543 = vld [vmem:[#allocation2 + $0x4c] sm:$0xf]
    %v544 = vld [vmem:[#allocation2 + $0x50] sm:$0xf]
    %v545 = vld [vmem:[#allocation2 + $0x54] sm:$0xf]
    %v546 = vld [vmem:[#allocation2 + $0x58] sm:$0xf]
    %v547 = vld [vmem:[#allocation2 + $0x5c] sm:$0xf]
    %v548 = vld [vmem:[#allocation2 + $0x60] sm:$0xf]
    %v549 = vld [vmem:[#allocation2 + $0x64] sm:$0xf]
    %v550 = vld [vmem:[#allocation2 + $0x68] sm:$0xf]
    %v551 = vld [vmem:[#allocation2 + $0x6c] sm:$0xf]
    %v552 = vld [vmem:[#allocation2 + $0x70] sm:$0xf]
    %v553 = vld [vmem:[#allocation2 + $0x74] sm:$0xf]
    %v554 = vld [vmem:[#allocation2 + $0x78] sm:$0xf]
    %v555 = vld [vmem:[#allocation2 + $0x7c] sm:$0xf]
    %v556 = vld [vmem:[%s6] sm:$0x1]
    %v558 = vlaneseq
    %v559 = vshrl.u32 %v558, 7
    %v560 = vsub.s32 0, %v559
    %v561 = vrot.slane %v556, %v560
    %v595 = vunpack.c.l.b16 %v524
    %v596 = vunpack.c.l.b16 %v525
    %v597 = vunpack.c.l.b16 %v526
    %v598 = vunpack.c.l.b16 %v527
    %v599 = vunpack.c.l.b16 %v528
    %v600 = vunpack.c.l.b16 %v529
    %v601 = vunpack.c.l.b16 %v530
    %v602 = vunpack.c.l.b16 %v531
    %v603 = vunpack.c.l.b16 %v532
    %v604 = vunpack.c.l.b16 %v533
    %v605 = vunpack.c.l.b16 %v534
    %v606 = vunpack.c.l.b16 %v535
    %v607 = vunpack.c.l.b16 %v536
    %v608 = vunpack.c.l.b16 %v537
    %v609 = vunpack.c.l.b16 %v538
    %v610 = vunpack.c.l.b16 %v539
    %v611 = vunpack.c.l.b16 %v540
    %v612 = vunpack.c.l.b16 %v541
    %v613 = vunpack.c.l.b16 %v542
    %v614 = vunpack.c.l.b16 %v543
    %v615 = vunpack.c.l.b16 %v544
    %v616 = vunpack.c.l.b16 %v545
    %v617 = vunpack.c.l.b16 %v546
    %v618 = vunpack.c.l.b16 %v547
    %v619 = vunpack.c.l.b16 %v548
    %v620 = vunpack.c.l.b16 %v549
    %v621 = vunpack.c.l.b16 %v550
    %v622 = vunpack.c.l.b16 %v551
    %v623 = vunpack.c.l.b16 %v552
    %v624 = vunpack.c.l.b16 %v553
    %v625 = vunpack.c.l.b16 %v554
    %v626 = vunpack.c.l.b16 %v555
    %v627 = vpack.c.b16 %v596, %v595
    %v628 = vpack.c.b16 %v598, %v597
    %v629 = vpack.c.b16 %v600, %v599
    %v630 = vpack.c.b16 %v602, %v601
    %v631 = vpack.c.b16 %v604, %v603
    %v632 = vpack.c.b16 %v606, %v605
    %v633 = vpack.c.b16 %v608, %v607
    %v634 = vpack.c.b16 %v610, %v609
    %v635 = vpack.c.b16 %v612, %v611
    %v636 = vpack.c.b16 %v614, %v613
    %v637 = vpack.c.b16 %v616, %v615
    %v638 = vpack.c.b16 %v618, %v617
    %v639 = vpack.c.b16 %v620, %v619
    %v640 = vpack.c.b16 %v622, %v621
    %v641 = vpack.c.b16 %v624, %v623
    %v642 = vpack.c.b16 %v626, %v625
    %659 = vmatprep.subr.bf16.mxu0 0
    %660 = vmatpush1.bf16.msra.mxu0 %v634
    %661 = vmatprep.subr.bf16.mxu0 0
    %662 = vmatpush1.bf16.msra.mxu0 %v633
    %663 = vmatprep.subr.bf16.mxu0 0
    %664 = vmatpush1.bf16.msra.mxu0 %v632
    %665 = vmatprep.subr.bf16.mxu0 0
    %666 = vmatpush1.bf16.msra.mxu0 %v631
    %667 = vmatprep.subr.bf16.mxu0 0
    %668 = vmatpush1.bf16.msra.mxu0 %v630
    %669 = vmatprep.subr.bf16.mxu0 0
    %670 = vmatpush1.bf16.msra.mxu0 %v629
    %671 = vmatprep.subr.bf16.mxu0 0
    %672 = vmatpush1.bf16.msra.mxu0 %v628
    %673 = vmatprep.subr.bf16.mxu0 0
    %674 = vmatpush1.bf16.msra.mxu0 %v627
    %675 = vmatprep.subr.bf16.mxu0 0
    %676 = vmatpush2.bf16.msra.mxu0 %v642
    %677 = vmatprep.subr.bf16.mxu0 0
    %678 = vmatpush2.bf16.msra.mxu0 %v641
    %679 = vmatprep.subr.bf16.mxu0 0
    %680 = vmatpush2.bf16.msra.mxu0 %v640
    %681 = vmatprep.subr.bf16.mxu0 0
    %682 = vmatpush2.bf16.msra.mxu0 %v639
    %683 = vmatprep.subr.bf16.mxu0 0
    %684 = vmatpush2.bf16.msra.mxu0 %v638
    %685 = vmatprep.subr.bf16.mxu0 0
    %686 = vmatpush2.bf16.msra.mxu0 %v637
    %687 = vmatprep.subr.bf16.mxu0 0
    %688 = vmatpush2.bf16.msra.mxu0 %v636
    %689 = vmatprep.subr.bf16.mxu0 0
    %690 = vmatpush2.bf16.msra.mxu0 %v635
    %691 = vmatprep.mubr.bf16.mxu0 %v509
    %692 = vmatmul.mubr.bf16.gmra.mxu0 %v508
    %v693 = vpop.f32.mrf.mxu0
    %v694 = vadd.f32 %v561, %v693
    %v695 = vpop.f32.mrf.mxu0
    %v696 = vpop.f32.mrf.mxu0
    %v697 = vadd.f32 %v561, %v696
    %v698 = vpop.f32.mrf.mxu0
    %699 = vmatprep.mubr.bf16.mxu0 %v511
    %700 = vmatmul.mubr.bf16.gmra.mxu0 %v510
    %v701 = vpop.f32.mrf.mxu0
    %v702 = vadd.f32 %v561, %v701
    %v703 = vpop.f32.mrf.mxu0
    %v704 = vpop.f32.mrf.mxu0
    %v705 = vadd.f32 %v561, %v704
    %v706 = vpop.f32.mrf.mxu0
    %707 = vmatprep.mubr.bf16.mxu0 %v513
    %708 = vmatmul.mubr.bf16.gmra.mxu0 %v512
    %v709 = vpop.f32.mrf.mxu0
    %v710 = vadd.f32 %v561, %v709
    %v711 = vpop.f32.mrf.mxu0
    %v712 = vpop.f32.mrf.mxu0
    %v713 = vadd.f32 %v561, %v712
    %v714 = vpop.f32.mrf.mxu0
    %715 = vmatprep.mubr.bf16.mxu0 %v515
    %716 = vmatmul.mubr.bf16.gmra.mxu0 %v514
    %v717 = vpop.f32.mrf.mxu0
    %v718 = vadd.f32 %v561, %v717
    %v719 = vpop.f32.mrf.mxu0
    %v720 = vpop.f32.mrf.mxu0
    %v721 = vadd.f32 %v561, %v720
    %v722 = vpop.f32.mrf.mxu0
    %723 = vmatprep.mubr.bf16.mxu0 %v517
    %724 = vmatmul.mubr.bf16.gmra.mxu0 %v516
    %v725 = vpop.f32.mrf.mxu0
    %v726 = vadd.f32 %v561, %v725
    %v727 = vpop.f32.mrf.mxu0
    %v728 = vpop.f32.mrf.mxu0
    %v729 = vadd.f32 %v561, %v728
    %v730 = vpop.f32.mrf.mxu0
    %731 = vmatprep.mubr.bf16.mxu0 %v519
    %732 = vmatmul.mubr.bf16.gmra.mxu0 %v518
    %v733 = vpop.f32.mrf.mxu0
    %v734 = vadd.f32 %v561, %v733
    %v735 = vpop.f32.mrf.mxu0
    %v736 = vpop.f32.mrf.mxu0
    %v737 = vadd.f32 %v561, %v736
    %v738 = vpop.f32.mrf.mxu0
    %739 = vmatprep.mubr.bf16.mxu0 %v521
    %740 = vmatmul.mubr.bf16.gmra.mxu0 %v520
    %v741 = vpop.f32.mrf.mxu0
    %v742 = vadd.f32 %v561, %v741
    %v743 = vpop.f32.mrf.mxu0
    %v744 = vpop.f32.mrf.mxu0
    %v745 = vadd.f32 %v561, %v744
    %v746 = vpop.f32.mrf.mxu0
    %747 = vmatprep.mubr.bf16.mxu0 %v523
    %748 = vmatmul.mubr.bf16.gmra.mxu0 %v522
    %v749 = vpop.f32.mrf.mxu0
    %v750 = vadd.f32 %v561, %v749
    %v751 = vpop.f32.mrf.mxu0
    %v752 = vpop.f32.mrf.mxu0
    %v753 = vadd.f32 %v561, %v752
    %v754 = vpop.f32.mrf.mxu0
    %755 = vdwg.mxu0
    %v756 = vmax.f32 %v694, 0.0
    %v757 = vmax.f32 %v697, 0.0
    %v758 = vmax.f32 %v702, 0.0
    %v759 = vmax.f32 %v705, 0.0
    %v760 = vmax.f32 %v710, 0.0
    %v761 = vmax.f32 %v713, 0.0
    %v762 = vmax.f32 %v718, 0.0
    %v763 = vmax.f32 %v721, 0.0
    %v764 = vmax.f32 %v726, 0.0
    %v765 = vmax.f32 %v729, 0.0
    %v766 = vmax.f32 %v734, 0.0
    %v767 = vmax.f32 %v737, 0.0
    %v768 = vmax.f32 %v742, 0.0
    %v769 = vmax.f32 %v745, 0.0
    %v770 = vmax.f32 %v750, 0.0
    %v771 = vmax.f32 %v753, 0.0
    %v772 = vpack.c.bf16 %v757, %v756
    %v773 = vpack.c.bf16 %v759, %v758
    %v774 = vpack.c.bf16 %v761, %v760
    %v775 = vpack.c.bf16 %v763, %v762
    %v776 = vpack.c.bf16 %v765, %v764
    %v777 = vpack.c.bf16 %v767, %v766
    %v778 = vpack.c.bf16 %v769, %v768
    %v779 = vpack.c.bf16 %v771, %v770
    %v780 = vld [vmem:[#allocation5] sm:$0xf]
    %v781 = vld [vmem:[#allocation5 + $0x4] sm:$0xf]
    %v782 = vld [vmem:[#allocation5 + $0x8] sm:$0xf]
    %v783 = vld [vmem:[#allocation5 + $0xc] sm:$0xf]
    %v784 = vld [vmem:[#allocation5 + $0x10] sm:$0xf]
    %v785 = vld [vmem:[#allocation5 + $0x14] sm:$0xf]
    %v786 = vld [vmem:[#allocation5 + $0x18] sm:$0xf]
    %v787 = vld [vmem:[#allocation5 + $0x1c] sm:$0xf]
    %v788 = vld [vmem:[#allocation5 + $0x20] sm:$0xf]
    %v789 = vld [vmem:[#allocation5 + $0x24] sm:$0xf]
    %v790 = vld [vmem:[#allocation5 + $0x28] sm:$0xf]
    %v791 = vld [vmem:[#allocation5 + $0x2c] sm:$0xf]
    %v792 = vld [vmem:[#allocation5 + $0x30] sm:$0xf]
    %v793 = vld [vmem:[#allocation5 + $0x34] sm:$0xf]
    %v794 = vld [vmem:[#allocation5 + $0x38] sm:$0xf]
    %v795 = vld [vmem:[#allocation5 + $0x3c] sm:$0xf]
    %v796 = vld [vmem:[%s8] sm:$0x1]
    %v798 = vlaneseq
    %v799 = vshrl.u32 %v798, 7
    %v800 = vsub.s32 0, %v799
    %v801 = vrot.slane %v796, %v800
    %v819 = vunpack.c.l.b16 %v780
    %v820 = vunpack.c.l.b16 %v781
    %v821 = vunpack.c.l.b16 %v782
    %v822 = vunpack.c.l.b16 %v783
    %v823 = vunpack.c.l.b16 %v784
    %v824 = vunpack.c.l.b16 %v785
    %v825 = vunpack.c.l.b16 %v786
    %v826 = vunpack.c.l.b16 %v787
    %v827 = vunpack.c.l.b16 %v788
    %v828 = vunpack.c.l.b16 %v789
    %v829 = vunpack.c.l.b16 %v790
    %v830 = vunpack.c.l.b16 %v791
    %v831 = vunpack.c.l.b16 %v792
    %v832 = vunpack.c.l.b16 %v793
    %v833 = vunpack.c.l.b16 %v794
    %v834 = vunpack.c.l.b16 %v795
    %v835 = vpack.c.b16 %v820, %v819
    %v836 = vpack.c.b16 %v822, %v821
    %v837 = vpack.c.b16 %v824, %v823
    %v838 = vpack.c.b16 %v826, %v825
    %v839 = vpack.c.b16 %v828, %v827
    %v840 = vpack.c.b16 %v830, %v829
    %v841 = vpack.c.b16 %v832, %v831
    %v842 = vpack.c.b16 %v834, %v833
    %851 = vmatprep.subr.bf16.mxu0 0
    %852 = vmatpush1.bf16.msra.mxu0 %v842
    %853 = vmatprep.subr.bf16.mxu0 0
    %854 = vmatpush1.bf16.msra.mxu0 %v841
    %855 = vmatprep.subr.bf16.mxu0 0
    %856 = vmatpush1.bf16.msra.mxu0 %v840
    %857 = vmatprep.subr.bf16.mxu0 0
    %858 = vmatpush1.bf16.msra.mxu0 %v839
    %859 = vmatprep.subr.bf16.mxu0 0
    %860 = vmatpush1.bf16.msra.mxu0 %v838
    %861 = vmatprep.subr.bf16.mxu0 0
    %862 = vmatpush1.bf16.msra.mxu0 %v837
    %863 = vmatprep.subr.bf16.mxu0 0
    %864 = vmatpush1.bf16.msra.mxu0 %v836
    %865 = vmatprep.subr.bf16.mxu0 0
    %866 = vmatpush1.bf16.msra.mxu0 %v835
    %867 = vmatprep.subr.bf16.mxu0 0
    %868 = vmatpush2.bf16.msra.mxu0 0
    %869 = vmatprep.subr.bf16.mxu0 0
    %870 = vmatpush2.bf16.msra.mxu0 0
    %871 = vmatprep.subr.bf16.mxu0 0
    %872 = vmatpush2.bf16.msra.mxu0 0
    %873 = vmatprep.subr.bf16.mxu0 0
    %874 = vmatpush2.bf16.msra.mxu0 0
    %875 = vmatprep.subr.bf16.mxu0 0
    %876 = vmatpush2.bf16.msra.mxu0 0
    %877 = vmatprep.subr.bf16.mxu0 0
    %878 = vmatpush2.bf16.msra.mxu0 0
    %879 = vmatprep.subr.bf16.mxu0 0
    %880 = vmatpush2.bf16.msra.mxu0 0
    %881 = vmatprep.subr.bf16.mxu0 0
    %882 = vmatpush2.bf16.msra.mxu0 0
    %883 = vmatprep.mubr.bf16.mxu0 0
    %884 = vmatmul.mubr.bf16.gmra.mxu0 %v772
    %v885 = vpop.f32.mrf.mxu0
    %v886 = vadd.f32 %v801, %v885
    %v887 = vpop.f32.mrf.mxu0
    %v888 = vpop.f32.mrf.mxu0
    %v889 = vadd.f32 %v801, %v888
    %v890 = vpop.f32.mrf.mxu0
    %891 = vmatprep.mubr.bf16.mxu0 0
    %892 = vmatmul.mubr.bf16.gmra.mxu0 %v773
    %v893 = vpop.f32.mrf.mxu0
    %v894 = vadd.f32 %v801, %v893
    %v895 = vpop.f32.mrf.mxu0
    %v896 = vpop.f32.mrf.mxu0
    %v897 = vadd.f32 %v801, %v896
    %v898 = vpop.f32.mrf.mxu0
    %899 = vmatprep.mubr.bf16.mxu0 0
    %900 = vmatmul.mubr.bf16.gmra.mxu0 %v774
    %v901 = vpop.f32.mrf.mxu0
    %v902 = vadd.f32 %v801, %v901
    %v903 = vpop.f32.mrf.mxu0
    %v904 = vpop.f32.mrf.mxu0
    %v905 = vadd.f32 %v801, %v904
    %v906 = vpop.f32.mrf.mxu0
    %907 = vmatprep.mubr.bf16.mxu0 0
    %908 = vmatmul.mubr.bf16.gmra.mxu0 %v775
    %v909 = vpop.f32.mrf.mxu0
    %v910 = vadd.f32 %v801, %v909
    %v911 = vpop.f32.mrf.mxu0
    %v912 = vpop.f32.mrf.mxu0
    %v913 = vadd.f32 %v801, %v912
    %v914 = vpop.f32.mrf.mxu0
    %915 = vmatprep.mubr.bf16.mxu0 0
    %916 = vmatmul.mubr.bf16.gmra.mxu0 %v776
    %v917 = vpop.f32.mrf.mxu0
    %v918 = vadd.f32 %v801, %v917
    %v919 = vpop.f32.mrf.mxu0
    %v920 = vpop.f32.mrf.mxu0
    %v921 = vadd.f32 %v801, %v920
    %v922 = vpop.f32.mrf.mxu0
    %923 = vmatprep.mubr.bf16.mxu0 0
    %924 = vmatmul.mubr.bf16.gmra.mxu0 %v777
    %v925 = vpop.f32.mrf.mxu0
    %v926 = vadd.f32 %v801, %v925
    %v927 = vpop.f32.mrf.mxu0
    %v928 = vpop.f32.mrf.mxu0
    %v929 = vadd.f32 %v801, %v928
    %v930 = vpop.f32.mrf.mxu0
    %931 = vmatprep.mubr.bf16.mxu0 0
    %932 = vmatmul.mubr.bf16.gmra.mxu0 %v778
    %v933 = vpop.f32.mrf.mxu0
    %v934 = vadd.f32 %v801, %v933
    %v935 = vpop.f32.mrf.mxu0
    %v936 = vpop.f32.mrf.mxu0
    %v937 = vadd.f32 %v801, %v936
    %v938 = vpop.f32.mrf.mxu0
    %939 = vmatprep.mubr.bf16.mxu0 0
    %940 = vmatmul.mubr.bf16.gmra.mxu0 %v779
    %v941 = vpop.f32.mrf.mxu0
    %v942 = vadd.f32 %v801, %v941
    %v943 = vpop.f32.mrf.mxu0
    %v944 = vpop.f32.mrf.mxu0
    %v945 = vadd.f32 %v801, %v944
    %v946 = vpop.f32.mrf.mxu0
    %947 = vdwg.mxu0
    %948 = vst [vmem:[#allocation7] sm:$0xff] %v886
    %949 = vst [vmem:[#allocation7 + $0x8] sm:$0xff] %v889
    %950 = vst [vmem:[#allocation7 + $0x10] sm:$0xff] %v894
    %951 = vst [vmem:[#allocation7 + $0x18] sm:$0xff] %v897
    %952 = vst [vmem:[#allocation7 + $0x20] sm:$0xff] %v902
    %953 = vst [vmem:[#allocation7 + $0x28] sm:$0xff] %v905
    %954 = vst [vmem:[#allocation7 + $0x30] sm:$0xff] %v910
    %955 = vst [vmem:[#allocation7 + $0x38] sm:$0xff] %v913
    %956 = vst [vmem:[#allocation7 + $0x40] sm:$0xff] %v918
    %957 = vst [vmem:[#allocation7 + $0x48] sm:$0xff] %v921
    %958 = vst [vmem:[#allocation7 + $0x50] sm:$0xff] %v926
    %959 = vst [vmem:[#allocation7 + $0x58] sm:$0xff] %v929
    %960 = vst [vmem:[#allocation7 + $0x60] sm:$0xff] %v934
    %961 = vst [vmem:[#allocation7 + $0x68] sm:$0xff] %v937
    %962 = vst [vmem:[#allocation7 + $0x70] sm:$0xff] %v942
    %963 = vst [vmem:[#allocation7 + $0x78] sm:$0xff] %v945
    // Predicated region
    $region46: #{tpu_custom_call.1} parent=1 // pred_check
      _
    $region47: #{tpu_custom_call.1} parent=1 // pred_check_branch
      %965 = sbr.rel (0) target = $region49
    $region48: #{tpu_custom_call.1} parent=1 // pred_region
      %s967 = ssub.s32 2048, 2048
      %968 = vsyncadd [#allocation4], %s967
      %s969 = sshll.u32 [#allocation7], 4
      %s970 = int_to_ptr.vmem [resolvable:$true] %s969
      %975 = dma.vmem_to_hbm [thread:$0]  %s970, 2048, %s9, [#allocation4], 128, 128, 8
    $region49: #{tpu_custom_call.1} parent=1 // pred_fallthru
      _
    // Predicated region
    $region50: #{tpu_custom_call.1} parent=1 // pred_check
      _
    $region51: #{tpu_custom_call.1} parent=1 // pred_check_branch
      %977 = sbr.rel (0) target = $region53
    $region52: #{tpu_custom_call.1} parent=1 // pred_region
      %978 = dma.done [#allocation4], 2048
    $region53: #{tpu_custom_call.1} parent=1 // pred_fallthru
      _
    %979 = vsyncpa [#allocation3], 1
    %980 = vsyncpa [#allocation6], 1
    %981 = vsyncpa [#allocation4], 1

</llo_original>
